<compile_context>
chip_gen: v7x
topology: tpu7x:2x2x1
jax: 0.10.0
libtpu: 0.0.40
codegen_flags: <defaults>
</compile_context>

<pallas_src>
import jax
import jax.numpy as jnp
from jax.experimental import pallas as pl
from jax.experimental.pallas import tpu as pltpu

EIGEN_REGULARIZATION_WEIGHT = 0.001

_LANES = 128
_BLOCK_ROWS = 2048              # (2048, 128) f32 = 1 MiB per input block
_SMALL_MAX_ELEMS = 512 * 1024   # <= 2 MiB f32 per input -> single full-array block


# ----------------------------- small-path kernels ---------------------------- #
# Inputs are full-array VMEM blocks (exact logical extent, no padding, no grid,
# no double-buffering).  Outputs are scalar vectors in SMEM.

def _sum1_kernel(a_ref, out_ref):
    out_ref[0] = jnp.sum(a_ref[...].astype(jnp.float32))


def _sum2_kernel(a_ref, b_ref, out_ref):
    out_ref[0] = jnp.sum(a_ref[...].astype(jnp.float32))
    out_ref[1] = jnp.sum(b_ref[...].astype(jnp.float32))


def _counts_kernel(src_ref, est_ref, out_ref):
    src = src_ref[...]
    est = est_ref[...]
    out_ref[0] = jnp.sum((src < est).astype(jnp.float32))   # over-estimation
    out_ref[1] = jnp.sum((src > est).astype(jnp.float32))   # under-estimation


def _fused_reg_kernel(loss_ref, leig_ref, src_ref, est_ref, sums_ref, cnt_ref):
    sums_ref[0] = jnp.sum(loss_ref[...].astype(jnp.float32))
    sums_ref[1] = jnp.sum(leig_ref[...].astype(jnp.float32))
    src = src_ref[...]
    est = est_ref[...]
    cnt_ref[0] = jnp.sum((src < est).astype(jnp.float32))
    cnt_ref[1] = jnp.sum((src > est).astype(jnp.float32))


def _fused_noreg_kernel(loss_ref, src_ref, est_ref, sums_ref, cnt_ref):
    # Dedicated kernel: no duplicated loss operand, no weight=0 * Inf hazard.
    sums_ref[0] = jnp.sum(loss_ref[...].astype(jnp.float32))
    src = src_ref[...]
    est = est_ref[...]
    cnt_ref[0] = jnp.sum((src < est).astype(jnp.float32))
    cnt_ref[1] = jnp.sum((src > est).astype(jnp.float32))


# ----------------------------- tiled-path kernels ---------------------------- #
# Grid over row-blocks of a (rows, 128) view; SMEM output is the accumulator
# (resident across the reduction axis).  The ragged last block is masked with a
# 2-D sublane iota, so arbitrary row counts are safe.

def _make_tiled_sum_kernel(n_in, total_rows, block_rows):
    def kernel(*refs):
        out_ref = refs[n_in]
        i = pl.program_id(0)

        @pl.when(i == 0)
        def _():
            for j in range(n_in):
                out_ref[j] = jnp.float32(0.0)

        remaining = total_rows - i * block_rows
        rows = refs[0].shape[0]
        row_ids = jax.lax.broadcasted_iota(jnp.int32, (rows, _LANES), 0)
        mask = row_ids < remaining
        for j in range(n_in):
            x = jnp.where(mask, refs[j][...].astype(jnp.float32), 0.0)
            out_ref[j] = out_ref[j] + jnp.sum(x)
    return kernel


def _make_tiled_counts_kernel(total_rows, block_rows):
    def kernel(src_ref, est_ref, out_ref):
        i = pl.program_id(0)

        @pl.when(i == 0)
        def _():
            out_ref[0] = jnp.float32(0.0)
            out_ref[1] = jnp.float32(0.0)

        remaining = total_rows - i * block_rows
        rows = src_ref.shape[0]
        row_ids = jax.lax.broadcasted_iota(jnp.int32, (rows, _LANES), 0)
        mask = row_ids < remaining
        src = src_ref[...]
        est = est_ref[...]
        over = jnp.where(mask & (src < est), 1.0, 0.0)
        under = jnp.where(mask & (src > est), 1.0, 0.0)
        out_ref[0] = out_ref[0] + jnp.sum(over)
        out_ref[1] = out_ref[1] + jnp.sum(under)
    return kernel


# --------------------------- pallas_call builders ---------------------------- #

def _vmem_spec():
    return pl.BlockSpec(memory_space=pltpu.MemorySpace.VMEM)


def _smem_spec():
    return pl.BlockSpec(memory_space=pltpu.MemorySpace.SMEM)


def _bytes_of(*arrs):
    return sum(int(a.size) * a.dtype.itemsize for a in arrs)


def _sum1_call(a):
    return pl.pallas_call(
        _sum1_kernel,
        out_shape=jax.ShapeDtypeStruct((1,), jnp.float32),
        in_specs=[_vmem_spec()],
        out_specs=_smem_spec(),
        cost_estimate=pl.CostEstimate(flops=int(a.size), transcendentals=0,
                                      bytes_accessed=_bytes_of(a) + 4),
    )(a)


def _sum2_call(a, b):
    return pl.pallas_call(
        _sum2_kernel,
        out_shape=jax.ShapeDtypeStruct((2,), jnp.float32),
        in_specs=[_vmem_spec(), _vmem_spec()],
        out_specs=_smem_spec(),
        cost_estimate=pl.CostEstimate(flops=int(a.size) + int(b.size),
                                      transcendentals=0,
                                      bytes_accessed=_bytes_of(a, b) + 8),
    )(a, b)


def _counts_call(src, est):
    return pl.pallas_call(
        _counts_kernel,
        out_shape=jax.ShapeDtypeStruct((2,), jnp.float32),
        in_specs=[_vmem_spec(), _vmem_spec()],
        out_specs=_smem_spec(),
        cost_estimate=pl.CostEstimate(flops=4 * int(src.size), transcendentals=0,
                                      bytes_accessed=_bytes_of(src, est) + 8),
    )(src, est)


def _fused_reg_call(loss, l_eig, src, est):
    return pl.pallas_call(
        _fused_reg_kernel,
        out_shape=(jax.ShapeDtypeStruct((2,), jnp.float32),
                   jax.ShapeDtypeStruct((2,), jnp.float32)),
        in_specs=[_vmem_spec()] * 4,
        out_specs=(_smem_spec(), _smem_spec()),
        cost_estimate=pl.CostEstimate(flops=6 * int(loss.size), transcendentals=0,
                                      bytes_accessed=_bytes_of(loss, l_eig, src, est) + 16),
    )(loss, l_eig, src, est)


def _fused_noreg_call(loss, src, est):
    return pl.pallas_call(
        _fused_noreg_kernel,
        out_shape=(jax.ShapeDtypeStruct((1,), jnp.float32),
                   jax.ShapeDtypeStruct((2,), jnp.float32)),
        in_specs=[_vmem_spec()] * 3,
        out_specs=(_smem_spec(), _smem_spec()),
        cost_estimate=pl.CostEstimate(flops=5 * int(loss.size), transcendentals=0,
                                      bytes_accessed=_bytes_of(loss, src, est) + 12),
    )(loss, src, est)


def _tiled_sum_call(arrays_2d, total_rows, block_rows=_BLOCK_ROWS):
    n = len(arrays_2d)
    block_rows = min(block_rows, total_rows)
    grid = (pl.cdiv(total_rows, block_rows),)
    kern = _make_tiled_sum_kernel(n, total_rows, block_rows)
    return pl.pallas_call(
        kern,
        out_shape=jax.ShapeDtypeStruct((n,), jnp.float32),
        grid=grid,
        in_specs=[pl.BlockSpec((block_rows, _LANES), lambda i: (i, 0))
                  for _ in range(n)],
        out_specs=_smem_spec(),
        compiler_params=pltpu.CompilerParams(dimension_semantics=("arbitrary",)),
        cost_estimate=pl.CostEstimate(
            flops=sum(int(a.size) for a in arrays_2d), transcendentals=0,
            bytes_accessed=_bytes_of(*arrays_2d) + 4 * n),
    )(*arrays_2d)


def _tiled_counts_call(src2d, est2d, total_rows, block_rows=_BLOCK_ROWS):
    block_rows = min(block_rows, total_rows)
    grid = (pl.cdiv(total_rows, block_rows),)
    kern = _make_tiled_counts_kernel(total_rows, block_rows)
    return pl.pallas_call(
        kern,
        out_shape=jax.ShapeDtypeStruct((2,), jnp.float32),
        grid=grid,
        in_specs=[pl.BlockSpec((block_rows, _LANES), lambda i: (i, 0)),
                  pl.BlockSpec((block_rows, _LANES), lambda i: (i, 0))],
        out_specs=_smem_spec(),
        compiler_params=pltpu.CompilerParams(dimension_semantics=("arbitrary",)),
        cost_estimate=pl.CostEstimate(flops=4 * int(src2d.size), transcendentals=0,
                                      bytes_accessed=_bytes_of(src2d, est2d) + 8),
    )(src2d, est2d)


# ------------------------------ layout helpers -------------------------------- #

def _as_row(x):
    # Free metadata reshape (B,) -> (1, B): full-array block, no padding copy.
    return x.reshape(1, -1)


def _as_rows128(x):
    # Large-B path: (rows, 128) view.  Free reshape when B % 128 == 0.
    # TODO(synk): a fully copy-free ragged tail would need manual DMA; the pad
    # below only triggers on the rare large-B, B % 128 != 0 case.
    b = x.shape[0]
    rows = pl.cdiv(b, _LANES)
    padded = rows * _LANES
    if padded != b:
        x = jnp.pad(x, (0, padded - b))   # zero pad: 0-vs-0 is count-neutral
    return x.reshape(rows, _LANES), rows


# ----------------------- jitted (cached) entry points ------------------------ #

@jax.jit
def regularized_loss_sum(loss, l_eig, weight):
    """sum(loss) + weight * sum(l_eig)  (== sum(loss + weight*l_eig) up to f32 order)."""
    b = loss.shape[0]
    if b <= _SMALL_MAX_ELEMS:
        s = _sum2_call(_as_row(loss), _as_row(l_eig))
    else:
        a2d, rows = _as_rows128(loss)
        b2d, _ = _as_rows128(l_eig)
        s = _tiled_sum_call((a2d, b2d), rows)
    return s[0] + weight * s[1]


@jax.jit
def plain_loss_sum(loss):
    """sum(loss) — dedicated single-input kernel (no duplicated operand)."""
    b = loss.shape[0]
    if b <= _SMALL_MAX_ELEMS:
        s = _sum1_call(_as_row(loss))
    else:
        a2d, rows = _as_rows128(loss)
        s = _tiled_sum_call((a2d,), rows)
    return s[0]


@jax.jit
def over_under_correct(sources_num, source_estimation):
    """Returns ([over, under] int32, correct int32); no host sync."""
    b = sources_num.shape[0]
    if b <= _SMALL_MAX_ELEMS:
        c = _counts_call(_as_row(sources_num), _as_row(source_estimation))
    else:
        s2d, rows = _as_rows128(sources_num)
        e2d, _ = _as_rows128(source_estimation)
        c = _tiled_counts_call(s2d, e2d, rows)
    counts = c.astype(jnp.int32)
    correct = jnp.int32(b) - counts[0] - counts[1]
    return counts, correct


@jax.jit
def fused_reg_metrics(loss, l_eig, sources_num, source_estimation, weight):
    """Single-launch fused path (small B): regularized loss + counts + correct."""
    b = loss.shape[0]
    if b <= _SMALL_MAX_ELEMS:
        sums, c = _fused_reg_call(_as_row(loss), _as_row(l_eig),
                                  _as_row(sources_num), _as_row(source_estimation))
    else:
        a2d, rows = _as_rows128(loss)
        b2d, _ = _as_rows128(l_eig)
        sums = _tiled_sum_call((a2d, b2d), rows)
        s2d, _ = _as_rows128(sources_num)
        e2d, _ = _as_rows128(source_estimation)
        c = _tiled_counts_call(s2d, e2d, rows)
    counts = c.astype(jnp.int32)
    correct = jnp.int32(b) - counts[0] - counts[1]
    return sums[0] + weight * sums[1], counts, correct


@jax.jit
def fused_noreg_metrics(loss, sources_num, source_estimation):
    """Fused path with l_eig=None: dedicated kernel (no weight=0 trick)."""
    b = loss.shape[0]
    if b <= _SMALL_MAX_ELEMS:
        sums, c = _fused_noreg_call(_as_row(loss), _as_row(sources_num),
                                    _as_row(source_estimation))
    else:
        a2d, rows = _as_rows128(loss)
        sums = _tiled_sum_call((a2d,), rows)
        s2d, _ = _as_rows128(sources_num)
        e2d, _ = _as_rows128(source_estimation)
        c = _tiled_counts_call(s2d, e2d, rows)
    counts = c.astype(jnp.int32)
    correct = jnp.int32(b) - counts[0] - counts[1]
    return sums[0], counts, correct


@jax.jit
def _add_counts(acc, counts):
    return acc + counts


# ----------------------------- ParentModel port ------------------------------ #

class ParentModel:
    """JAX/Pallas port of the PyTorch ParentModel abstract base class."""

    def __init__(self, system_model=None):
        self.system_model = system_model
        self.under_estimation_counter = 0
        self.over_estimation_counter = 0
        self.training = False
        # Device-side [over, under] accumulator: no per-step host round trip.
        self._device_over_under = jnp.zeros((2,), dtype=jnp.int32)

    # TODO(synk): forward() is NotImplementedError in the PyTorch base class —
    # subclasses provide the actual network; nothing to lower here.
    def forward(self, x):
        raise NotImplementedError

    def train(self):
        self.training = True
        return self

    def eval(self):
        self.training = False
        return self

    def print_model_params(self):
        return None

    def get_model_params(self):
        return None

    def set_eigenregularization_schedular(self, init_value=EIGEN_REGULARIZATION_WEIGHT,
                                          step_size=10, gamma=0.5):
        self.schedular_counter = 0
        self.schedular_step_size = step_size
        self.schedular_gamma = gamma
        self.eigenregularization_weight = init_value
        self.schedular_acc_current = 0
        self.schedular_patience_ascending = 5
        self.schedular_patience_descending = 5
        self.schedular_patience_counter_descending = 0
        self.schedular_patience_counter_ascending = 0
        self.schedular_low_threshold = 70
        self.schedular_high_threshold = 90
        self.schedular_min_weight = min(0.01, init_value / 10)
        self.schedular_max_weight = init_value * 10

    def get_eigenregularization_weight(self):
        return self.eigenregularization_weight

    def update_eigenregularization_weight(self, acc):
        rounded_acc = acc // 5 * 5
        if rounded_acc > self.schedular_acc_current or rounded_acc >= self.schedular_high_threshold:
            self.schedular_patience_counter_ascending += 1
            if acc > 95:
                self.schedular_patience_counter_ascending += 1
            self.schedular_patience_counter_descending = 0
            if self.schedular_patience_counter_ascending >= self.schedular_patience_ascending:
                self.eigenregularization_weight = max(
                    self.schedular_min_weight,
                    self.eigenregularization_weight * self.schedular_gamma)
                self.schedular_patience_counter_ascending = 0
        elif rounded_acc <= self.schedular_acc_current or rounded_acc <= self.schedular_low_threshold:
            self.schedular_patience_counter_descending += 1
            self.schedular_patience_counter_ascending = 0
            if self.schedular_patience_counter_descending >= self.schedular_patience_descending:
                self.eigenregularization_weight = min(
                    self.schedular_max_weight,
                    self.eigenregularization_weight / self.schedular_gamma)
                self.schedular_patience_counter_descending = 0
        else:
            self.schedular_patience_counter_ascending = 0
            self.schedular_patience_counter_descending = 0
        self.schedular_acc_current = rounded_acc

    def sync_counters(self):
        """One host transfer for the accumulated over/under counters."""
        over, under = map(int, jax.device_get(self._device_over_under))
        self.over_estimation_counter = over
        self.under_estimation_counter = under
        return over, under

    def source_estimation_accuracy(self, sources_num, source_estimation=None):
        if source_estimation is None:
            return 0
        counts, correct = over_under_correct(sources_num, source_estimation)
        if not self.training:
            # Async device-side accumulation — no blocking host sync per step.
            self._device_over_under = _add_counts(self._device_over_under, counts)
        return correct  # device int32 scalar; call int(...) / sync lazily

    def get_regularized_loss(self, loss, l_eig=None):
        if l_eig is not None:
            return regularized_loss_sum(loss, l_eig, self.eigenregularization_weight)
        return plain_loss_sum(loss)

    def get_regularized_loss_and_accuracy(self, loss, sources_num,
                                          source_estimation, l_eig=None):
        """Fused single-launch path (loss + accuracy), no host sync."""
        if l_eig is None:
            reg_loss, counts, correct = fused_noreg_metrics(
                loss, sources_num, source_estimation)
        else:
            reg_loss, counts, correct = fused_reg_metrics(
                loss, l_eig, sources_num, source_estimation,
                self.eigenregularization_weight)
        if not self.training:
            self._device_over_under = _add_counts(self._device_over_under, counts)
        return reg_loss, correct


# ----------------------------------- main ------------------------------------ #

if __name__ == "__main__":
    key = jax.random.PRNGKey(0)
    k1, k2, k3, k4 = jax.random.split(key, 4)

    # B is deliberately NOT a multiple of 8 or 128.
    B = 200
    loss = jax.random.normal(k1, (B,), dtype=jnp.float32)
    l_eig = jax.random.normal(k2, (B,), dtype=jnp.float32)
    sources_num = jax.random.randint(k3, (B,), 1, 5, dtype=jnp.int32)
    source_estimation = jax.random.randint(k4, (B,), 1, 5, dtype=jnp.int32)

    model = ParentModel(system_model=None)
    model.set_eigenregularization_schedular()
    w = model.get_eigenregularization_weight()

    # --- references (pure JAX) ---
    ref_reg = jnp.sum(loss + w * l_eig)
    ref_plain = jnp.sum(loss)
    ref_correct = int(jnp.sum(source_estimation == sources_num))
    ref_over = int(jnp.sum(sources_num < source_estimation))
    ref_under = int(jnp.sum(sources_num > source_estimation))

    # --- regularized loss (Pallas) ---
    out_reg = model.get_regularized_loss(loss, l_eig)
    jax.block_until_ready(out_reg)
    assert jnp.allclose(out_reg, ref_reg, rtol=1e-5, atol=1e-4), (out_reg, ref_reg)

    out_plain = model.get_regularized_loss(loss, None)
    jax.block_until_ready(out_plain)
    assert jnp.allclose(out_plain, ref_plain, rtol=1e-5, atol=1e-4), (out_plain, ref_plain)

    # --- source estimation accuracy (device-side counters, lazy sync) ---
    correct = model.source_estimation_accuracy(sources_num, source_estimation)
    assert int(correct) == ref_correct, (int(correct), ref_correct)
    model.sync_counters()
    assert model.over_estimation_counter == ref_over
    assert model.under_estimation_counter == ref_under
    assert model.source_estimation_accuracy(sources_num, None) == 0

    # --- fused single-launch paths ---
    model2 = ParentModel(system_model=None)
    model2.set_eigenregularization_schedular()
    fused_loss, fused_correct = model2.get_regularized_loss_and_accuracy(
        loss, sources_num, source_estimation, l_eig)
    jax.block_until_ready(fused_loss)
    assert jnp.allclose(fused_loss, ref_reg, rtol=1e-5, atol=1e-4), (fused_loss, ref_reg)
    assert int(fused_correct) == ref_correct

    noreg_loss, noreg_correct = model2.get_regularized_loss_and_accuracy(
        loss, sources_num, source_estimation, None)
    jax.block_until_ready(noreg_loss)
    assert jnp.allclose(noreg_loss, ref_plain, rtol=1e-5, atol=1e-4), (noreg_loss, ref_plain)
    assert int(noreg_correct) == ref_correct
    model2.sync_counters()
    assert model2.over_estimation_counter == 2 * ref_over
    assert model2.under_estimation_counter == 2 * ref_under

    # --- tiled large-B reduction path (exercises grid + SMEM accumulator) ---
    B2 = 2 * _BLOCK_ROWS * _LANES + 131149   # > _SMALL_MAX_ELEMS, ragged tail
    kb1, kb2, kb3, kb4 = jax.random.split(jax.random.PRNGKey(1), 4)
    big_loss = jax.random.normal(kb1, (B2,), dtype=jnp.float32)
    big_leig = jax.random.normal(kb2, (B2,), dtype=jnp.float32)
    big_src = jax.random.randint(kb3, (B2,), 1, 5, dtype=jnp.int32)
    big_est = jax.random.randint(kb4, (B2,), 1, 5, dtype=jnp.int32)

    big_reg = regularized_loss_sum(big_loss, big_leig, w)
    jax.block_until_ready(big_reg)
    big_ref = jnp.sum(big_loss) + w * jnp.sum(big_leig)
    assert jnp.allclose(big_reg, big_ref, rtol=1e-2, atol=1.0), (big_reg, big_ref)

    big_plain = plain_loss_sum(big_loss)
    jax.block_until_ready(big_plain)
    assert jnp.allclose(big_plain, jnp.sum(big_loss), rtol=1e-2, atol=1.0)

    big_counts, big_correct = over_under_correct(big_src, big_est)
    big_counts = jax.device_get(big_counts)
    assert int(big_counts[0]) == int(jnp.sum(big_src < big_est))
    assert int(big_counts[1]) == int(jnp.sum(big_src > big_est))
    assert int(big_correct) == int(jnp.sum(big_src == big_est))

    # exercise the host-side scheduler bookkeeping (pure Python, no tensors)
    model.update_eigenregularization_weight(85.0)

    print("KERNEL_OK")
</pallas_src>

<mosaic_0001>
module attributes {stable_mosaic.version = 11 : i64} {
  func.func @_sum2_kernel(%arg0: memref<1x200xf32, #tpu.memory_space<vmem>>, %arg1: memref<1x200xf32, #tpu.memory_space<vmem>>, %arg2: memref<2xf32, #tpu.memory_space<smem>>) attributes {dimension_semantics = [], scalar_prefetch = 0 : i64, scratch_operands = 0 : i64, tpu.core_type = #tpu.core_type<tc>} {
    %c0 = arith.constant 0 : index
    %c0_0 = arith.constant 0 : index
    %0 = vector.load %arg0[%c0, %c0_0] : memref<1x200xf32, #tpu.memory_space<vmem>>, vector<1x200xf32>
    %1 = vector.shape_cast %0 : vector<1x200xf32> to vector<1x1x200xf32>
    %cst = arith.constant dense<0.000000e+00> : vector<1xf32>
    %2 = vector.multi_reduction <add>, %1, %cst [1, 2] : vector<1x1x200xf32> to vector<1xf32>
    %3 = vector.shape_cast %2 : vector<1xf32> to vector<1x1x1xf32>
    %4 = vector.extract %3[0, 0, 0] : f32 from vector<1x1x1xf32>
    %c0_1 = arith.constant 0 : index
    %5 = memref.load %arg2[%c0_1] : memref<2xf32, #tpu.memory_space<smem>>
    memref.store %4, %arg2[%c0_1] : memref<2xf32, #tpu.memory_space<smem>>
    %c0_2 = arith.constant 0 : index
    %c0_3 = arith.constant 0 : index
    %6 = vector.load %arg1[%c0_2, %c0_3] : memref<1x200xf32, #tpu.memory_space<vmem>>, vector<1x200xf32>
    %7 = vector.shape_cast %6 : vector<1x200xf32> to vector<1x1x200xf32>
    %cst_4 = arith.constant dense<0.000000e+00> : vector<1xf32>
    %8 = vector.multi_reduction <add>, %7, %cst_4 [1, 2] : vector<1x1x200xf32> to vector<1xf32>
    %9 = vector.shape_cast %8 : vector<1xf32> to vector<1x1x1xf32>
    %10 = vector.extract %9[0, 0, 0] : f32 from vector<1x1x1xf32>
    %c1 = arith.constant 1 : index
    %11 = memref.load %arg2[%c1] : memref<2xf32, #tpu.memory_space<smem>>
    memref.store %10, %arg2[%c1] : memref<2xf32, #tpu.memory_space<smem>>
    return
  }
}

</mosaic_0001>

<llo_original>
// kernel: regularized_loss_sum.1
$region0: #{regularized_loss_sum.1}
  #allocation0 [shape = 'u32[]', space=smem, size = 0x4, offset = 0x4, fixed_abs, tag = 'smem constant byte address 0x4 - core index']
  #allocation1 [shape = 'u32[144,128]{1,0:T(1,128)}', space=vmem, size = 0x12000, scoped, tag = 'internal scratch']
  %s0 = inlined_call_operand.vmem [shape: f32[1,200], index: 0, kind: input, shape index: {}]
  %s1 = inlined_call_operand.vmem [shape: f32[1,200], index: 1, kind: input, shape index: {}]
  %s2 = inlined_call_operand.vmem [shape: f32[2], index: 2, kind: output, shape index: {}]
  %s3 = sld [smem:[#allocation0]]
  $region18: #{regularized_loss_sum.1} parent=0
    _
  %s5 = ssub.s32 1, %s3
  %s6 = scalar_select 0, %s5, %s3
  $region1: #{regularized_loss_sum.1} parent=0
    #allocation2 [shape = 'u8[512]{0}', space=smem, size = 0x200, scoped, tag = 'output window, operand 0, single buffered']
    #allocation3 [shape = 's32[1]{0}', space=sflag, size = 0x4, scoped, tag = 'scoped memory for regularized_loss_sum.1']
    %7 = vsyncpa [#allocation3], 0
    // Predicated region
    $region2: #{regularized_loss_sum.1} parent=1 // pred_check
      _
    $region3: #{regularized_loss_sum.1} parent=1 // pred_check_branch
      %9 = sbr.rel (0) target = $region5
    $region4: #{regularized_loss_sum.1} parent=1 // pred_region
      _
    $region5: #{regularized_loss_sum.1} parent=1 // pred_fallthru
      _
    // Predicated region
    $region6: #{regularized_loss_sum.1} parent=1 // pred_check
      _
    $region7: #{regularized_loss_sum.1} parent=1 // pred_check_branch
      %11 = sbr.rel (0) target = $region9
    $region8: #{regularized_loss_sum.1} parent=1 // pred_region
      _
    $region9: #{regularized_loss_sum.1} parent=1 // pred_fallthru
      _
    %v12 = vld [vmem:[%s0] sm:$0x3]
    %v14 = vlaneseq
    %v15 = vshrl.u32 %v14, 7
    %v16 = vsub.s32 0, %v15
    %v17 = vrot.slane %v12, %v16
    %v18 = vlaneseq
    %v19 = vshrl.u32 %v18, 7
    %v20 = vsub.s32 1, %v19
    %v21 = vrot.slane %v12, %v20
    %vm24 = vcmask 1040384
    %v25 = vsel %vm24, %v17, 0.0
    %vm26 = vcmask 581632
    %v27 = vsel %vm26, %v21, 0.0
    %v28 = vadd.f32 %v25, %v27
    %29 = vadd.xlane.f32.xlu0 %v28
    %v30 = vpop.xlane.xlu0 %29
    %v31 = vrot.slane %v30, 4
    %v32 = vadd.f32 %v30, %v31
    %v33 = vrot.slane %v32, 2
    %v34 = vadd.f32 %v32, %v33
    %v35 = vrot.slane %v34, 1
    %v36 = vadd.f32 %v34, %v35
    %s37 = vtos %v36
    %s38 = scalar_lea.smem [#allocation2], 0
    %39 = sst [smem:[%s38]] %s37
    %v40 = vld [vmem:[%s1] sm:$0x3]
    %v42 = vlaneseq
    %v43 = vshrl.u32 %v42, 7
    %v44 = vsub.s32 0, %v43
    %v45 = vrot.slane %v40, %v44
    %v46 = vlaneseq
    %v47 = vshrl.u32 %v46, 7
    %v48 = vsub.s32 1, %v47
    %v49 = vrot.slane %v40, %v48
    %v52 = vsel %vm24, %v45, 0.0
    %v53 = vsel %vm26, %v49, 0.0
    %v54 = vadd.f32 %v52, %v53
    %55 = vadd.xlane.f32.xlu0 %v54
    %v56 = vpop.xlane.xlu0 %55
    %v57 = vrot.slane %v56, 4
    %v58 = vadd.f32 %v56, %v57
    %v59 = vrot.slane %v58, 2
    %v60 = vadd.f32 %v58, %v59
    %v61 = vrot.slane %v60, 1
    %v62 = vadd.f32 %v60, %v61
    %s63 = vtos %v62
    %s64 = scalar_lea.smem [#allocation2], 1
    %65 = sst [smem:[%s64]] %s63
    // Predicated region
    $region10: #{regularized_loss_sum.1} parent=1 // pred_check
      _
    $region11: #{regularized_loss_sum.1} parent=1 // pred_check_branch
      %67 = sbr.rel (0) target = $region13
    $region12: #{regularized_loss_sum.1} parent=1 // pred_region
      %s69 = ssub.s32 16, 16
      %70 = vsyncadd [#allocation3], %s69
      %s72 = sshll.u32 %s2, 4
      %s73 = int_to_ptr.vmem [resolvable:$true] %s72
      %75 = dma.smem_to_vmem [#allocation2], 16, %s73, [#allocation3]
    $region13: #{regularized_loss_sum.1} parent=1 // pred_fallthru
      _
    // Predicated region
    $region14: #{regularized_loss_sum.1} parent=1 // pred_check
      _
    $region15: #{regularized_loss_sum.1} parent=1 // pred_check_branch
      %77 = sbr.rel (0) target = $region17
    $region16: #{regularized_loss_sum.1} parent=1 // pred_region
      %78 = dma.done [#allocation3], 16
    $region17: #{regularized_loss_sum.1} parent=1 // pred_fallthru
      _
    %79 = sfence
    %80 = vsyncpa [#allocation3], 1

</llo_original>
